<compile_context>
chip_gen: v6e
topology: v6e:2x2x1
jax: 0.10.0
libtpu: 0.0.40
codegen_flags: <defaults>
</compile_context>

<pallas_src>
import math

import jax
import jax.numpy as jnp
from jax.experimental import pallas as pl
from jax.experimental.pallas import tpu as pltpu


def _round_up(v, m):
    return -(-v // m) * m


# ----------------------------------------------------------------------------
# Kernel
# ----------------------------------------------------------------------------
def _make_kernel(c, n, bt, eps=1e-5):
    X = bt * n                       # lanes per tile, lane x = b*n + j
    inv_cn = 1.0 / float(c * n)

    def kernel(x_ref, w1_ref, b1_ref, g_ref, beta_ref, out_ref):
        # x_ref    : (c*T, X)  batch chunk on the lane axis
        # w1_ref   : (c, c*T)  tconv1 weight
        # b1_ref   : (c, 1)    tconv1 bias
        # g_ref    : (c, X)    LN-gamma * (wf @ w2), tiled across the bt groups
        # beta_ref : (1, X)    fused LN / conv2 / fc biases, tiled
        x = x_ref[...]

        # tconv1: one MXU matmul + a broadcast VPU bias add.
        xt1 = jnp.dot(w1_ref[...], x, preferred_element_type=jnp.float32)
        xt1 = xt1 + b1_ref[...]                               # (c, X)

        # LayerNorm over (n, c) per batch element, single-pass statistics.
        # Sublane-reduce to per-lane partial sums, then group each batch's n
        # lanes with small indicator matmuls.  The indicators are generated
        # in-kernel from iotas: no HBM arrays, no input DMAs.
        s1 = jnp.sum(xt1, axis=0, keepdims=True)              # (1, X)
        s2 = jnp.sum(xt1 * xt1, axis=0, keepdims=True)        # (1, X)

        lane = jax.lax.broadcasted_iota(jnp.int32, (X, bt), 0)
        grp = jax.lax.broadcasted_iota(jnp.int32, (X, bt), 1) * n
        seg = jnp.where((lane >= grp) & (lane < grp + n), 1.0, 0.0)       # (X, bt)
        lane_t = jax.lax.broadcasted_iota(jnp.int32, (bt, X), 1)
        grp_t = jax.lax.broadcasted_iota(jnp.int32, (bt, X), 0) * n
        segt = jnp.where((lane_t >= grp_t) & (lane_t < grp_t + n), 1.0, 0.0)  # (bt, X)

        sum1 = jnp.dot(s1, seg, preferred_element_type=jnp.float32)   # (1, bt)
        sum2 = jnp.dot(s2, seg, preferred_element_type=jnp.float32)   # (1, bt)
        mean = sum1 * inv_cn
        var = jnp.maximum(sum2 * inv_cn - mean * mean, 0.0)   # clamp rounding
        inv = jax.lax.rsqrt(var + eps)
        mean_x = jnp.dot(mean, segt, preferred_element_type=jnp.float32)  # (1, X)
        inv_x = jnp.dot(inv, segt, preferred_element_type=jnp.float32)    # (1, X)

        xn = (xt1 - mean_x) * inv_x                           # (c, X)

        # LN affine + tconv2 + fc are folded exactly into g_eff / beta_eff:
        # a sublane reduce + bias, stored lane-dense.
        out_ref[...] = (jnp.sum(xn * g_ref[...], axis=0, keepdims=True)
                        + beta_ref[...])                      # (1, X)

    return kernel


# ----------------------------------------------------------------------------
# Tiling: VMEM-budget-aware, lane-dense, megacore-friendly
# ----------------------------------------------------------------------------
def _tile_vmem_bytes(bt, n, c, T):
    """Rough per-grid-step VMEM footprint (bytes): double-buffered pipelined
    blocks + resident params + the larger in-kernel temporaries."""
    it = 4
    X = bt * n
    lanes = _round_up(X, 128)
    kt = _round_up(c * T, 8)
    ct = _round_up(c, 8)
    x_blk = kt * lanes * it                      # pipelined x block
    out_blk = 8 * lanes * it                     # pipelined (1, X) output block
    resident = (2 * ct + 8) * lanes * it         # g_eff / beta_eff tiles
    params = ct * (_round_up(c * T, 128) + 128) * it   # w1, b1
    temps = 3 * ct * lanes * it                  # xt1 / xn / products
    seg = (X * _round_up(bt, 128) + _round_up(bt, 8) * lanes) * it
    return 2 * (x_blk + out_blk) + resident + params + temps + seg


def _pick_batch_tile(B, n, c, T, vmem_budget=36 << 20):
    """Choose (bt, Bp): batch rows per grid step and the padded batch size.

    - bt*n is a multiple of 128 -> every block and every store is lane-dense.
    - lane width targeted at the measured 512-2048 pipelining sweet spot,
      capped so bt <= 256 (bounds the in-kernel indicator matmuls) and the
      per-step footprint stays under the VMEM budget.
    - >= 2 grid steps whenever the batch allows it (v7x megacore sharding and
      DMA/compute overlap need more than one step).
    - batch is zero-padded to a multiple of bt, never an illegal block.
    """
    step = 128 // math.gcd(n, 128)               # smallest lane-dense bt
    cap_lanes = (2048 // n) // step * step       # largest bt with bt*n <= 2048
    cap_ind = (256 // step) * step               # keep indicator matmuls small
    bt = max(step, min(cap_lanes, cap_ind))
    bt = min(bt, _round_up(B, step))             # don't over-pad small batches
    while bt > step and _tile_vmem_bytes(bt, n, c, T) > vmem_budget:
        bt -= step
    if B > step and -(-B // bt) < 2:             # prefer >= 2 grid steps
        bt = max(step, _round_up(-(-B // 2), step))
    # TODO(synk): if even bt == step exceeds the budget (very large c*T*n),
    # the n axis would need to be split with cross-tile LN accumulation.
    return bt, _round_up(B, bt)


# ----------------------------------------------------------------------------
# Wrapper
# ----------------------------------------------------------------------------
@jax.jit
def output_layer(x, params):
    """x: (B, c, T, n) float32 NCHW as in PyTorch. Returns (B, 1, 1, n).

    Keep this jitted (and ideally inlined with the producer of x) so the
    NCHW -> (c*T, B*n) transpose below fuses instead of adding an HBM pass.
    """
    B, c, T, n = x.shape
    f32 = jnp.float32

    # ---- parameter prep (exact algebra, done once under jit) ----
    w1 = params["w1"].reshape(c, c * T).astype(f32)   # Conv2d(c,c,(T,1)) weight
    b1 = params["b1"].reshape(c, 1).astype(f32)
    w2 = params["w2"].reshape(c, c).astype(f32)       # Conv2d(c,c,(1,1)) weight
    b2 = params["b2"].reshape(c, 1).astype(f32)
    wf = params["wf"].reshape(1, c).astype(f32)       # Conv2d(c,1,1) weight
    bf = params["bf"].reshape(1, 1).astype(f32)
    g = params["ln_gamma"].T.astype(f32)              # (n,c) -> (c,n)
    be = params["ln_beta"].T.astype(f32)

    # tconv2 and fc are affine with no nonlinearity between them:
    # fold them exactly into the LayerNorm affine.
    w_eff = wf @ w2                                   # (1, c)
    b_eff = wf @ b2 + bf                              # (1, 1)
    g_eff = w_eff.T * g                               # (c, n)
    beta_eff = w_eff @ be + b_eff                     # (1, n)

    bt, Bp = _pick_batch_tile(B, n, c, T)
    X = bt * n
    n_tiles = Bp // bt

    # Batch onto the lane axis; zero-pad to a lane-dense multiple of the tile.
    x_flat = jnp.transpose(x, (1, 2, 0, 3)).reshape(c * T, B * n)
    if Bp != B:
        x_flat = jnp.pad(x_flat, ((0, 0), (0, (Bp - B) * n)))

    # Fused affine tiled to ONE tile width only (kept resident in VMEM).
    g_tile = jnp.tile(g_eff, (1, bt))                 # (c, X)
    beta_tile = jnp.tile(beta_eff, (1, bt))           # (1, X)

    # TODO(synk): optionally cast x_flat / w1 to bfloat16 (keeping f32
    # accumulation and LN math) for ~2x less HBM traffic on v6e/v7x; left
    # off here to preserve f32-exact semantics vs. the PyTorch module.

    out = pl.pallas_call(
        _make_kernel(c, n, bt),
        out_shape=jax.ShapeDtypeStruct((1, Bp * n), jnp.float32),
        grid_spec=pltpu.PrefetchScalarGridSpec(
            num_scalar_prefetch=0,
            grid=(n_tiles,),
            in_specs=[
                pl.BlockSpec((c * T, X), lambda t: (0, t)),   # x tile
                pl.BlockSpec((c, c * T), lambda t: (0, 0)),   # w1
                pl.BlockSpec((c, 1), lambda t: (0, 0)),       # b1
                pl.BlockSpec((c, X), lambda t: (0, 0)),       # g_eff tile
                pl.BlockSpec((1, X), lambda t: (0, 0)),       # beta_eff tile
            ],
            out_specs=pl.BlockSpec((1, X), lambda t: (0, t)),
        ),
        compiler_params=pltpu.CompilerParams(
            dimension_semantics=("parallel",),     # batch tiles independent
            vmem_limit_bytes=48 * 1024 * 1024,     # under v7x's 64 MiB VMEM
        ),
    )(x_flat, w1, b1, g_tile, beta_tile)

    return out[:, : B * n].reshape(B, 1, 1, n)


# ----------------------------------------------------------------------------
# Pure-JAX reference (matches the PyTorch module)
# ----------------------------------------------------------------------------
def reference_output_layer(x, params):
    B, c, T, n = x.shape
    w1 = params["w1"].reshape(c, c * T)
    xt1 = jnp.einsum("ok,bkn->bon", w1, x.reshape(B, c * T, n)) \
          + params["b1"][None, :, None]                                  # (B,c,n)
    # LayerNorm over (n, c) jointly per batch (biased variance, eps=1e-5)
    mean = jnp.mean(xt1, axis=(1, 2), keepdims=True)
    var = jnp.mean((xt1 - mean) ** 2, axis=(1, 2), keepdims=True)
    xn = (xt1 - mean) / jnp.sqrt(var + 1e-5)
    xln = xn * params["ln_gamma"].T[None] + params["ln_beta"].T[None]
    y = jnp.einsum("oc,bcn->bon", params["w2"].reshape(c, c), xln) \
        + params["b2"][None, :, None]
    out = jnp.einsum("oc,bcn->bon", params["wf"].reshape(1, c), y) \
          + params["bf"][None, :, None]
    return out.reshape(B, 1, 1, n)


if __name__ == "__main__":
    B, c, T, n = 2, 4, 8, 16

    key = jax.random.PRNGKey(0)
    keys = jax.random.split(key, 10)

    params = {
        "w1": 0.1 * jax.random.normal(keys[0], (c, c, T, 1), jnp.float32),
        "b1": 0.1 * jax.random.normal(keys[1], (c,), jnp.float32),
        "ln_gamma": 1.0 + 0.1 * jax.random.normal(keys[2], (n, c), jnp.float32),
        "ln_beta": 0.1 * jax.random.normal(keys[3], (n, c), jnp.float32),
        "w2": 0.1 * jax.random.normal(keys[4], (c, c, 1, 1), jnp.float32),
        "b2": 0.1 * jax.random.normal(keys[5], (c,), jnp.float32),
        "wf": 0.1 * jax.random.normal(keys[6], (1, c, 1, 1), jnp.float32),
        "bf": 0.1 * jax.random.normal(keys[7], (1,), jnp.float32),
    }

    x = jax.random.normal(keys[8], (B, c, T, n), jnp.float32)

    out = output_layer(x, params)
    out = jax.block_until_ready(out)

    ref = reference_output_layer(x, params)
    assert out.shape == (B, 1, 1, n)
    assert jnp.allclose(out, ref, atol=1e-4, rtol=1e-4), "mismatch vs reference"

    print("KERNEL_OK")
</pallas_src>

<mosaic_0001>
module attributes {stable_mosaic.version = 11 : i64} {
  func.func @kernel(%arg0: i32, %arg1: memref<32x128xf32, #tpu.memory_space<vmem>>, %arg2: memref<4x32xf32, #tpu.memory_space<vmem>>, %arg3: memref<4x1xf32, #tpu.memory_space<vmem>>, %arg4: memref<4x128xf32, #tpu.memory_space<vmem>>, %arg5: memref<1x128xf32, #tpu.memory_space<vmem>>, %arg6: memref<1x128xf32, #tpu.memory_space<vmem>>) attributes {dimension_semantics = [#tpu.dimension_semantics<parallel>], iteration_bounds = array<i64: 1>, scalar_prefetch = 0 : i64, scratch_operands = 0 : i64, tpu.core_type = #tpu.core_type<tc>, window_params = [{transform_indices = @transform_0, window_bounds = array<i64: 32, 128>}, {pipeline_mode = #tpu.pipeline_mode<synchronous>, transform_indices = @transform_1, window_bounds = array<i64: 4, 32>}, {pipeline_mode = #tpu.pipeline_mode<synchronous>, transform_indices = @transform_2, window_bounds = array<i64: 4, 1>}, {pipeline_mode = #tpu.pipeline_mode<synchronous>, transform_indices = @transform_3, window_bounds = array<i64: 4, 128>}, {pipeline_mode = #tpu.pipeline_mode<synchronous>, transform_indices = @transform_4, window_bounds = array<i64: 1, 128>}, {transform_indices = @transform_5, window_bounds = array<i64: 1, 128>}]} {
    %c0 = arith.constant 0 : index
    %c0_0 = arith.constant 0 : index
    %0 = vector.load %arg1[%c0, %c0_0] : memref<32x128xf32, #tpu.memory_space<vmem>>, vector<32x128xf32>
    %c0_1 = arith.constant 0 : index
    %c0_2 = arith.constant 0 : index
    %1 = vector.load %arg2[%c0_1, %c0_2] : memref<4x32xf32, #tpu.memory_space<vmem>>, vector<4x32xf32>
    %cst = arith.constant dense<0.000000e+00> : vector<4x128xf32>
    %2 = tpu.matmul %1, %0, %cst {dimension_numbers = #tpu.dot_dimension_numbers<[1], [0], [0], [1], [0, 0, 1, 1], [], []>} : vector<4x32xf32>, vector<32x128xf32>, vector<4x128xf32> -> vector<4x128xf32>
    %c0_3 = arith.constant 0 : index
    %c0_4 = arith.constant 0 : index
    %3 = vector.load %arg3[%c0_3, %c0_4] : memref<4x1xf32, #tpu.memory_space<vmem>>, vector<4x1xf32>
    %4 = vector.broadcast %3 : vector<4x1xf32> to vector<4x128xf32>
    %5 = arith.addf %2, %4 : vector<4x128xf32>
    %cst_5 = arith.constant dense<0.000000e+00> : vector<128xf32>
    %6 = vector.multi_reduction <add>, %5, %cst_5 [0] : vector<4x128xf32> to vector<128xf32>
    %7 = vector.shape_cast %6 : vector<128xf32> to vector<1x128xf32>
    %8 = arith.mulf %5, %5 : vector<4x128xf32>
    %cst_6 = arith.constant dense<0.000000e+00> : vector<128xf32>
    %9 = vector.multi_reduction <add>, %8, %cst_6 [0] : vector<4x128xf32> to vector<128xf32>
    %10 = vector.shape_cast %9 : vector<128xf32> to vector<1x128xf32>
    %11 = tpu.iota {dimensions = array<i32: 0>} : vector<128x8xi32>
    %12 = tpu.iota {dimensions = array<i32: 1>} : vector<128x8xi32>
    %c16_i32 = arith.constant 16 : i32
    %13 = vector.broadcast %c16_i32 : i32 to vector<128x8xi32>
    %14 = arith.muli %12, %13 : vector<128x8xi32>
    %15 = arith.cmpi sge, %11, %14 : vector<128x8xi32>
    %c16_i32_7 = arith.constant 16 : i32
    %16 = vector.broadcast %c16_i32_7 : i32 to vector<128x8xi32>
    %17 = arith.addi %14, %16 : vector<128x8xi32>
    %18 = arith.cmpi slt, %11, %17 : vector<128x8xi32>
    %19 = arith.andi %15, %18 : vector<128x8xi1>
    %cst_8 = arith.constant 1.000000e+00 : f32
    %cst_9 = arith.constant 0.000000e+00 : f32
    %20 = vector.broadcast %cst_8 : f32 to vector<128x8xf32>
    %21 = vector.broadcast %cst_9 : f32 to vector<128x8xf32>
    %22 = arith.select %19, %20, %21 : vector<128x8xi1>, vector<128x8xf32>
    %23 = tpu.iota {dimensions = array<i32: 1>} : vector<8x128xi32>
    %24 = tpu.iota {dimensions = array<i32: 0>} : vector<8x128xi32>
    %c16_i32_10 = arith.constant 16 : i32
    %25 = vector.broadcast %c16_i32_10 : i32 to vector<8x128xi32>
    %26 = arith.muli %24, %25 : vector<8x128xi32>
    %27 = arith.cmpi sge, %23, %26 : vector<8x128xi32>
    %c16_i32_11 = arith.constant 16 : i32
    %28 = vector.broadcast %c16_i32_11 : i32 to vector<8x128xi32>
    %29 = arith.addi %26, %28 : vector<8x128xi32>
    %30 = arith.cmpi slt, %23, %29 : vector<8x128xi32>
    %31 = arith.andi %27, %30 : vector<8x128xi1>
    %cst_12 = arith.constant 1.000000e+00 : f32
    %cst_13 = arith.constant 0.000000e+00 : f32
    %32 = vector.broadcast %cst_12 : f32 to vector<8x128xf32>
    %33 = vector.broadcast %cst_13 : f32 to vector<8x128xf32>
    %34 = arith.select %31, %32, %33 : vector<8x128xi1>, vector<8x128xf32>
    %cst_14 = arith.constant dense<0.000000e+00> : vector<1x8xf32>
    %35 = tpu.matmul %7, %22, %cst_14 {dimension_numbers = #tpu.dot_dimension_numbers<[1], [0], [0], [1], [0, 0, 1, 1], [], []>} : vector<1x128xf32>, vector<128x8xf32>, vector<1x8xf32> -> vector<1x8xf32>
    %cst_15 = arith.constant dense<0.000000e+00> : vector<1x8xf32>
    %36 = tpu.matmul %10, %22, %cst_15 {dimension_numbers = #tpu.dot_dimension_numbers<[1], [0], [0], [1], [0, 0, 1, 1], [], []>} : vector<1x128xf32>, vector<128x8xf32>, vector<1x8xf32> -> vector<1x8xf32>
    %cst_16 = arith.constant 1.562500e-02 : f32
    %37 = vector.broadcast %cst_16 : f32 to vector<1x8xf32>
    %38 = arith.mulf %35, %37 : vector<1x8xf32>
    %cst_17 = arith.constant 1.562500e-02 : f32
    %39 = vector.broadcast %cst_17 : f32 to vector<1x8xf32>
    %40 = arith.mulf %36, %39 : vector<1x8xf32>
    %41 = arith.mulf %38, %38 : vector<1x8xf32>
    %42 = arith.subf %40, %41 : vector<1x8xf32>
    %cst_18 = arith.constant 0.000000e+00 : f32
    %43 = vector.broadcast %cst_18 : f32 to vector<1x8xf32>
    %44 = arith.maximumf %42, %43 : vector<1x8xf32>
    %cst_19 = arith.constant 9.99999974E-6 : f32
    %45 = vector.broadcast %cst_19 : f32 to vector<1x8xf32>
    %46 = arith.addf %44, %45 : vector<1x8xf32>
    %47 = math.rsqrt %46 : vector<1x8xf32>
    %cst_20 = arith.constant dense<0.000000e+00> : vector<1x128xf32>
    %48 = tpu.matmul %38, %34, %cst_20 {dimension_numbers = #tpu.dot_dimension_numbers<[1], [0], [0], [1], [0, 0, 1, 1], [], []>} : vector<1x8xf32>, vector<8x128xf32>, vector<1x128xf32> -> vector<1x128xf32>
    %cst_21 = arith.constant dense<0.000000e+00> : vector<1x128xf32>
    %49 = tpu.matmul %47, %34, %cst_21 {dimension_numbers = #tpu.dot_dimension_numbers<[1], [0], [0], [1], [0, 0, 1, 1], [], []>} : vector<1x8xf32>, vector<8x128xf32>, vector<1x128xf32> -> vector<1x128xf32>
    %50 = vector.broadcast %48 : vector<1x128xf32> to vector<4x128xf32>
    %51 = arith.subf %5, %50 : vector<4x128xf32>
    %52 = vector.broadcast %49 : vector<1x128xf32> to vector<4x128xf32>
    %53 = arith.mulf %51, %52 : vector<4x128xf32>
    %c0_22 = arith.constant 0 : index
    %c0_23 = arith.constant 0 : index
    %54 = vector.load %arg4[%c0_22, %c0_23] : memref<4x128xf32, #tpu.memory_space<vmem>>, vector<4x128xf32>
    %55 = arith.mulf %53, %54 : vector<4x128xf32>
    %cst_24 = arith.constant dense<0.000000e+00> : vector<128xf32>
    %56 = vector.multi_reduction <add>, %55, %cst_24 [0] : vector<4x128xf32> to vector<128xf32>
    %57 = vector.shape_cast %56 : vector<128xf32> to vector<1x128xf32>
    %c0_25 = arith.constant 0 : index
    %c0_26 = arith.constant 0 : index
    %58 = vector.load %arg5[%c0_25, %c0_26] : memref<1x128xf32, #tpu.memory_space<vmem>>, vector<1x128xf32>
    %59 = arith.addf %57, %58 : vector<1x128xf32>
    %c0_27 = arith.constant 0 : index
    %c0_28 = arith.constant 0 : index
    %60 = vector.load %arg6[%c0_27, %c0_28] : memref<1x128xf32, #tpu.memory_space<vmem>>, vector<1x128xf32>
    tpu.vector_store %arg6[%c0_27, %c0_28], %59 {strides = array<i32>} : memref<1x128xf32, #tpu.memory_space<vmem>>, vector<1x128xf32>,
    return
  }
  func.func @transform_0(%arg0: i32) -> (i32, i32) {
    %c0_i32 = arith.constant 0 : i32
    %c0_i32_0 = arith.constant 0 : i32
    return %c0_i32, %arg0 : i32, i32
  }
  func.func @transform_1(%arg0: i32) -> (i32, i32) {
    %c0_i32 = arith.constant 0 : i32
    %c0_i32_0 = arith.constant 0 : i32
    %c0_i32_1 = arith.constant 0 : i32
    return %c0_i32, %c0_i32_0 : i32, i32
  }
  func.func @transform_2(%arg0: i32) -> (i32, i32) {
    %c0_i32 = arith.constant 0 : i32
    %c0_i32_0 = arith.constant 0 : i32
    %c0_i32_1 = arith.constant 0 : i32
    return %c0_i32, %c0_i32_0 : i32, i32
  }
  func.func @transform_3(%arg0: i32) -> (i32, i32) {
    %c0_i32 = arith.constant 0 : i32
    %c0_i32_0 = arith.constant 0 : i32
    %c0_i32_1 = arith.constant 0 : i32
    return %c0_i32, %c0_i32_0 : i32, i32
  }
  func.func @transform_4(%arg0: i32) -> (i32, i32) {
    %c0_i32 = arith.constant 0 : i32
    %c0_i32_0 = arith.constant 0 : i32
    %c0_i32_1 = arith.constant 0 : i32
    return %c0_i32, %c0_i32_0 : i32, i32
  }
  func.func @transform_5(%arg0: i32) -> (i32, i32) {
    %c0_i32 = arith.constant 0 : i32
    %c0_i32_0 = arith.constant 0 : i32
    return %c0_i32, %arg0 : i32, i32
  }
}

</mosaic_0001>

<llo_original>
// kernel: tile.14
$region0: #{tile.14}
  %s0 = inlined_call_operand.vmem [shape: f32[4,8,16], index: 0, kind: input, shape index: {}]
  %s1 = inlined_call_operand.vmem [shape: f32[4,128], index: 1, kind: output, shape index: {}]
  $region1: #{tile.14} parent=0
    #allocation0 [shape = 'u8[4096]{0}', space=vmem, size = 0x1000, scoped, tag = 'scoped mem for output reshape']
    %v2 = vld [vmem:[%s0] ss:$8 sm:$0xf]
    %vm3 = vcmask 130048
    %4 = vst.msk [vmem:[#allocation0] sm:$0xf] %vm3, %v2
    %s5 = scalar_lea.vmem %s0, 7
    %v6 = vld [vmem:[%s5] ss:$8 sm:$0xf]
    %7 = vrot.lane.b32.xlu0 %v6, 112
    %v8 = vpop.permute.xlu0 %7
    %vm9 = vcmask 1048448
    %10 = vst.msk [vmem:[#allocation0] sm:$0xf] %vm9, %v8
    %s11 = scalar_lea.vmem %s0, 6
    %v12 = vld [vmem:[%s11] ss:$8 sm:$0xf]
    %13 = vrot.lane.b32.xlu0 %v12, 96
    %v14 = vpop.permute.xlu0 %13
    %vm15 = vcmask 917248
    %16 = vst.msk [vmem:[#allocation0] sm:$0xf] %vm15, %v14
    %s17 = scalar_lea.vmem %s0, 5
    %v18 = vld [vmem:[%s17] ss:$8 sm:$0xf]
    %19 = vrot.lane.b32.xlu0 %v18, 80
    %v20 = vpop.permute.xlu0 %19
    %vm21 = vcmask 786048
    %22 = vst.msk [vmem:[#allocation0] sm:$0xf] %vm21, %v20
    %s23 = scalar_lea.vmem %s0, 4
    %v24 = vld [vmem:[%s23] ss:$8 sm:$0xf]
    %25 = vrot.lane.b32.xlu0 %v24, 64
    %v26 = vpop.permute.xlu0 %25
    %vm27 = vcmask 654848
    %28 = vst.msk [vmem:[#allocation0] sm:$0xf] %vm27, %v26
    %s29 = scalar_lea.vmem %s0, 3
    %v30 = vld [vmem:[%s29] ss:$8 sm:$0xf]
    %31 = vrot.lane.b32.xlu0 %v30, 48
    %v32 = vpop.permute.xlu0 %31
    %vm33 = vcmask 523648
    %34 = vst.msk [vmem:[#allocation0] sm:$0xf] %vm33, %v32
    %s35 = scalar_lea.vmem %s0, 2
    %v36 = vld [vmem:[%s35] ss:$8 sm:$0xf]
    %37 = vrot.lane.b32.xlu0 %v36, 32
    %v38 = vpop.permute.xlu0 %37
    %vm39 = vcmask 392448
    %40 = vst.msk [vmem:[#allocation0] sm:$0xf] %vm39, %v38
    %s41 = scalar_lea.vmem %s0, 1
    %v42 = vld [vmem:[%s41] ss:$8 sm:$0xf]
    %43 = vrot.lane.b32.xlu0 %v42, 16
    %v44 = vpop.permute.xlu0 %43
    %vm45 = vcmask 261248
    %46 = vst.msk [vmem:[#allocation0] sm:$0xf] %vm45, %v44
    %s48 = sshll.u32 1, 4
    %s49 = ssub.s32 %s48, 1
    %v51 = vld [vmem:[#allocation0] sm:%s49]
    %s52 = sshll.u32 1, 4
    %s53 = ssub.s32 %s52, 1
    %54 = vst [vmem:[%s1] sm:%s53] %v51

// kernel: output_layer.1
$region0: #{output_layer.1}
  #allocation0 [shape = 'u32[]', space=smem, size = 0x4, offset = 0x4, fixed_abs, tag = 'smem constant byte address 0x4 - core index']
  #allocation1 [shape = 'u32[144,128]{1,0:T(1,128)}', space=vmem, size = 0x12000, scoped, tag = 'internal scratch']
  %s0 = inlined_call_operand.vmem [shape: f32[32,128], index: 0, kind: input, shape index: {}]
  %s1 = inlined_call_operand.vmem [shape: f32[4,32], index: 1, kind: input, shape index: {}]
  %s2 = inlined_call_operand.vmem [shape: f32[4,1], index: 2, kind: input, shape index: {}]
  %s3 = inlined_call_operand.vmem [shape: f32[4,128], index: 3, kind: input, shape index: {}]
  %s4 = inlined_call_operand.vmem [shape: f32[1,128], index: 4, kind: input, shape index: {}]
  %s5 = inlined_call_operand.vmem [shape: f32[1,128], index: 5, kind: output, shape index: {}]
  %s6 = sld [smem:[#allocation0]]
  $region30: #{output_layer.1} parent=0
    _
  %s8 = ssub.s32 1, %s6
  %s9 = scalar_select 0, %s8, %s6
  // Predicated region
  $region2: #{output_layer.1} parent=0 // pred_check
    _
  $region3: #{output_layer.1} parent=0 // pred_check_branch
    %11 = sbr.rel (0) target = $region5
  $region4: #{output_layer.1} parent=0 // pred_region
    _
  $region5: #{output_layer.1} parent=0 // pred_fallthru
    _
  // Predicated region
  $region6: #{output_layer.1} parent=0 // pred_check
    _
  $region7: #{output_layer.1} parent=0 // pred_check_branch
    %13 = sbr.rel (0) target = $region9
  $region8: #{output_layer.1} parent=0 // pred_region
    _
  $region9: #{output_layer.1} parent=0 // pred_fallthru
    _
  // Predicated region
  $region10: #{output_layer.1} parent=0 // pred_check
    _
  $region11: #{output_layer.1} parent=0 // pred_check_branch
    %15 = sbr.rel (0) target = $region13
  $region12: #{output_layer.1} parent=0 // pred_region
    _
  $region13: #{output_layer.1} parent=0 // pred_fallthru
    _
  // Predicated region
  $region14: #{output_layer.1} parent=0 // pred_check
    _
  $region15: #{output_layer.1} parent=0 // pred_check_branch
    %17 = sbr.rel (0) target = $region17
  $region16: #{output_layer.1} parent=0 // pred_region
    _
  $region17: #{output_layer.1} parent=0 // pred_fallthru
    _
  // Predicated region
  $region18: #{output_layer.1} parent=0 // pred_check
    _
  $region19: #{output_layer.1} parent=0 // pred_check_branch
    %19 = sbr.rel (0) target = $region21
  $region20: #{output_layer.1} parent=0 // pred_region
    _
  $region21: #{output_layer.1} parent=0 // pred_fallthru
    _
  %v20 = vld [vmem:[%s0] sm:$0xff]
  %v21 = vld [vmem:[%s0 + $0x8] sm:$0xff]
  %v22 = vld [vmem:[%s0 + $0x10] sm:$0xff]
  %v23 = vld [vmem:[%s0 + $0x18] sm:$0xff]
  %v24 = vld [vmem:[%s1] sm:$0xf]
  %v25 = vld [vmem:[%s2] sm:$0xf]
  %27 = vset.pattern.permute.xlu0 0
  %28 = vperm.xlu0 %27, %v25
  %v29 = vpop.permute.xlu0 %28
  %vm31 = vcmask 261120
  %v33 = vsel %vm31, %v24, 0
  %35 = vmatprep.subr.mxu0 0.0
  %36 = vmatpush1.msra.mxu0 0.0
  %37 = vmatprep.subr.mxu0 0.0
  %38 = vmatpush1.msra.mxu0 0.0
  %39 = vmatprep.subr.mxu0 0.0
  %40 = vmatpush1.msra.mxu0 0.0
  %41 = vmatprep.subr.mxu0 0.0
  %42 = vmatpush1.msra.mxu0 0.0
  %43 = vmatprep.subr.mxu0 0.0
  %44 = vmatpush1.msra.mxu0 0.0
  %45 = vmatprep.subr.mxu0 0.0
  %46 = vmatpush1.msra.mxu0 0.0
  %47 = vmatprep.subr.mxu0 0.0
  %48 = vmatpush1.msra.mxu0 0.0
  %49 = vmatprep.subr.mxu0 0.0
  %50 = vmatpush1.msra.mxu0 0.0
  %51 = vmatprep.subr.mxu0 0.0
  %52 = vmatpush1.msra.mxu0 0.0
  %53 = vmatprep.subr.mxu0 0.0
  %54 = vmatpush1.msra.mxu0 0.0
  %55 = vmatprep.subr.mxu0 0.0
  %56 = vmatpush1.msra.mxu0 0.0
  %57 = vmatprep.subr.mxu0 0.0
  %58 = vmatpush1.msra.mxu0 0.0
  %59 = vmatprep.subr.mxu0 0.0
  %60 = vmatpush1.msra.mxu0 %v23
  %61 = vmatprep.subr.mxu0 0.0
  %62 = vmatpush1.msra.mxu0 %v22
  %63 = vmatprep.subr.mxu0 0.0
  %64 = vmatpush1.msra.mxu0 %v21
  %65 = vmatprep.subr.mxu0 0.0
  %66 = vmatpush1.msra.mxu0 %v20
  %67 = vmatprep.subr.mxu0 0.0
  %68 = vmatpush2.msra.mxu0 0.0
  %69 = vmatprep.subr.mxu0 0.0
  %70 = vmatpush2.msra.mxu0 0.0
  %71 = vmatprep.subr.mxu0 0.0
  %72 = vmatpush2.msra.mxu0 0.0
  %73 = vmatprep.subr.mxu0 0.0
  %74 = vmatpush2.msra.mxu0 0.0
  %75 = vmatprep.subr.mxu0 0.0
  %76 = vmatpush2.msra.mxu0 0.0
  %77 = vmatprep.subr.mxu0 0.0
  %78 = vmatpush2.msra.mxu0 0.0
  %79 = vmatprep.subr.mxu0 0.0
  %80 = vmatpush2.msra.mxu0 0.0
  %81 = vmatprep.subr.mxu0 0.0
  %82 = vmatpush2.msra.mxu0 0.0
  %83 = vmatprep.subr.mxu0 0.0
  %84 = vmatpush2.msra.mxu0 0.0
  %85 = vmatprep.subr.mxu0 0.0
  %86 = vmatpush2.msra.mxu0 0.0
  %87 = vmatprep.subr.mxu0 0.0
  %88 = vmatpush2.msra.mxu0 0.0
  %89 = vmatprep.subr.mxu0 0.0
  %90 = vmatpush2.msra.mxu0 0.0
  %91 = vmatprep.subr.mxu0 0.0
  %92 = vmatpush2.msra.mxu0 0.0
  %93 = vmatprep.subr.mxu0 0.0
  %94 = vmatpush2.msra.mxu0 0.0
  %95 = vmatprep.subr.mxu0 0.0
  %96 = vmatpush2.msra.mxu0 0.0
  %97 = vmatprep.subr.mxu0 0.0
  %98 = vmatpush2.msra.mxu0 0.0
  %99 = vmatprep.mubr.f32.mxu0 0.0
  %100 = vmatmul.mubr.f32.gmra.mxu0 %v33
  %v101 = vpop.f32.mrf.mxu0
  %v102 = vadd.f32 %v29, %v101
  %v103 = vpop.f32.mrf.mxu0
  %104 = vdwg.mxu0
  %vm105 = vcmask 1043456
  %v106 = vsel %vm105, %v102, 0.0
  %v107 = vrot.slane %v106, 4
  %v108 = vadd.f32 %v106, %v107
  %v109 = vrot.slane %v108, 2
  %v110 = vadd.f32 %v108, %v109
  %v111 = vrot.slane %v110, 1
  %v112 = vadd.f32 %v110, %v111
  %v113 = vmul.f32 %v102, %v102
  %v114 = vsel %vm105, %v113, 0.0
  %v115 = vrot.slane %v114, 4
  %v116 = vadd.f32 %v114, %v115
  %v117 = vrot.slane %v116, 2
  %v118 = vadd.f32 %v116, %v117
  %v119 = vrot.slane %v118, 1
  %v120 = vadd.f32 %v118, %v119
  %v121 = vlaneseq
  %v122 = vshrl.u32 %v121, 7
  %v123 = vadd.s32 %v122, 8
  %v124 = vadd.s32 %v122, 16
  %v125 = vadd.s32 %v122, 24
  %v126 = vadd.s32 %v122, 32
  %v127 = vadd.s32 %v122, 40
  %v128 = vadd.s32 %v122, 48
  %v129 = vadd.s32 %v122, 56
  %v130 = vadd.s32 %v122, 64
  %v131 = vadd.s32 %v122, 72
  %v132 = vadd.s32 %v122, 80
  %v133 = vadd.s32 %v122, 88
  %v134 = vadd.s32 %v122, 96
  %v135 = vadd.s32 %v122, 104
  %v136 = vadd.s32 %v122, 112
  %v137 = vadd.s32 %v122, 120
  %v138 = vlaneseq
  %v139 = vand.u32 %v138, 127
  %v140 = vmul.u32 %v139, 16
  %vm141 = vcmp.ge.s32.totalorder %v122, %v140
  %vm142 = vcmp.ge.s32.totalorder %v123, %v140
  %vm143 = vcmp.ge.s32.totalorder %v124, %v140
  %vm144 = vcmp.ge.s32.totalorder %v125, %v140
  %vm145 = vcmp.ge.s32.totalorder %v126, %v140
  %vm146 = vcmp.ge.s32.totalorder %v127, %v140
  %vm147 = vcmp.ge.s32.totalorder %v128, %v140
  %vm148 = vcmp.ge.s32.totalorder %v129, %v140
  %vm149 = vcmp.ge.s32.totalorder %v130, %v140
  %vm150 = vcmp.ge.s32.totalorder %v131, %v140
  %vm151 = vcmp.ge.s32.totalorder %v132, %v140
  %vm152 = vcmp.ge.s32.totalorder %v133, %v140
  %vm153 = vcmp.ge.s32.totalorder %v134, %v140
  %vm154 = vcmp.ge.s32.totalorder %v135, %v140
  %vm155 = vcmp.ge.s32.totalorder %v136, %v140
  %vm156 = vcmp.ge.s32.totalorder %v137, %v140
  %v157 = vadd.s32 %v140, 16
  %vm158 = vcmp.lt.s32.totalorder %v122, %v157
  %vm159 = vcmp.lt.s32.totalorder %v123, %v157
  %vm160 = vcmp.lt.s32.totalorder %v124, %v157
  %vm161 = vcmp.lt.s32.totalorder %v125, %v157
  %vm162 = vcmp.lt.s32.totalorder %v126, %v157
  %vm163 = vcmp.lt.s32.totalorder %v127, %v157
  %vm164 = vcmp.lt.s32.totalorder %v128, %v157
  %vm165 = vcmp.lt.s32.totalorder %v129, %v157
  %vm166 = vcmp.lt.s32.totalorder %v130, %v157
  %vm167 = vcmp.lt.s32.totalorder %v131, %v157
  %vm168 = vcmp.lt.s32.totalorder %v132, %v157
  %vm169 = vcmp.lt.s32.totalorder %v133, %v157
  %vm170 = vcmp.lt.s32.totalorder %v134, %v157
  %vm171 = vcmp.lt.s32.totalorder %v135, %v157
  %vm172 = vcmp.lt.s32.totalorder %v136, %v157
  %vm173 = vcmp.lt.s32.totalorder %v137, %v157
  %vm174 = vmand %vm141, %vm158
  %vm175 = vmand %vm142, %vm159
  %vm176 = vmand %vm143, %vm160
  %vm177 = vmand %vm144, %vm161
  %vm178 = vmand %vm145, %vm162
  %vm179 = vmand %vm146, %vm163
  %vm180 = vmand %vm147, %vm164
  %vm181 = vmand %vm148, %vm165
  %vm182 = vmand %vm149, %vm166
  %vm183 = vmand %vm150, %vm167
  %vm184 = vmand %vm151, %vm168
  %vm185 = vmand %vm152, %vm169
  %vm186 = vmand %vm153, %vm170
  %vm187 = vmand %vm154, %vm171
  %vm188 = vmand %vm155, %vm172
  %vm189 = vmand %vm156, %vm173
  %v190 = vsel %vm174, 1.0, 0.0
  %v191 = vsel %vm175, 1.0, 0.0
  %v192 = vsel %vm176, 1.0, 0.0
  %v193 = vsel %vm177, 1.0, 0.0
  %v194 = vsel %vm178, 1.0, 0.0
  %v195 = vsel %vm179, 1.0, 0.0
  %v196 = vsel %vm180, 1.0, 0.0
  %v197 = vsel %vm181, 1.0, 0.0
  %v198 = vsel %vm182, 1.0, 0.0
  %v199 = vsel %vm183, 1.0, 0.0
  %v200 = vsel %vm184, 1.0, 0.0
  %v201 = vsel %vm185, 1.0, 0.0
  %v202 = vsel %vm186, 1.0, 0.0
  %v203 = vsel %vm187, 1.0, 0.0
  %v204 = vsel %vm188, 1.0, 0.0
  %v205 = vsel %vm189, 1.0, 0.0
  %v206 = vmul.u32 %v122, 16
  %vm207 = vcmp.ge.s32.totalorder %v139, %v206
  %v208 = vadd.s32 %v206, 16
  %vm209 = vcmp.lt.s32.totalorder %v139, %v208
  %vm210 = vmand %vm207, %vm209
  %v211 = vsel %vm210, 1.0, 0.0
  %212 = vmatprep.subr.mxu0 0.0
  %213 = vmatpush1.msra.mxu0 %v205
  %214 = vmatprep.subr.mxu0 0.0
  %215 = vmatpush1.msra.mxu0 %v204
  %216 = vmatprep.subr.mxu0 0.0
  %217 = vmatpush1.msra.mxu0 %v203
  %218 = vmatprep.subr.mxu0 0.0
  %219 = vmatpush1.msra.mxu0 %v202
  %220 = vmatprep.subr.mxu0 0.0
  %221 = vmatpush1.msra.mxu0 %v201
  %222 = vmatprep.subr.mxu0 0.0
  %223 = vmatpush1.msra.mxu0 %v200
  %224 = vmatprep.subr.mxu0 0.0
  %225 = vmatpush1.msra.mxu0 %v199
  %226 = vmatprep.subr.mxu0 0.0
  %227 = vmatpush1.msra.mxu0 %v198
  %228 = vmatprep.subr.mxu0 0.0
  %229 = vmatpush1.msra.mxu0 %v197
  %230 = vmatprep.subr.mxu0 0.0
  %231 = vmatpush1.msra.mxu0 %v196
  %232 = vmatprep.subr.mxu0 0.0
  %233 = vmatpush1.msra.mxu0 %v195
  %234 = vmatprep.subr.mxu0 0.0
  %235 = vmatpush1.msra.mxu0 %v194
  %236 = vmatprep.subr.mxu0 0.0
  %237 = vmatpush1.msra.mxu0 %v193
  %238 = vmatprep.subr.mxu0 0.0
  %239 = vmatpush1.msra.mxu0 %v192
  %240 = vmatprep.subr.mxu0 0.0
  %241 = vmatpush1.msra.mxu0 %v191
  %242 = vmatprep.subr.mxu0 0.0
  %243 = vmatpush1.msra.mxu0 %v190
  %244 = vmatprep.subr.mxu0 0.0
  %245 = vmatpush2.msra.mxu0 0.0
  %246 = vmatprep.subr.mxu0 0.0
  %247 = vmatpush2.msra.mxu0 0.0
  %248 = vmatprep.subr.mxu0 0.0
  %249 = vmatpush2.msra.mxu0 0.0
  %250 = vmatprep.subr.mxu0 0.0
  %251 = vmatpush2.msra.mxu0 0.0
  %252 = vmatprep.subr.mxu0 0.0
  %253 = vmatpush2.msra.mxu0 0.0
  %254 = vmatprep.subr.mxu0 0.0
  %255 = vmatpush2.msra.mxu0 0.0
  %256 = vmatprep.subr.mxu0 0.0
  %257 = vmatpush2.msra.mxu0 0.0
  %258 = vmatprep.subr.mxu0 0.0
  %259 = vmatpush2.msra.mxu0 0.0
  %260 = vmatprep.subr.mxu0 0.0
  %261 = vmatpush2.msra.mxu0 0.0
  %262 = vmatprep.subr.mxu0 0.0
  %263 = vmatpush2.msra.mxu0 0.0
  %264 = vmatprep.subr.mxu0 0.0
  %265 = vmatpush2.msra.mxu0 0.0
  %266 = vmatprep.subr.mxu0 0.0
  %267 = vmatpush2.msra.mxu0 0.0
  %268 = vmatprep.subr.mxu0 0.0
  %269 = vmatpush2.msra.mxu0 0.0
  %270 = vmatprep.subr.mxu0 0.0
  %271 = vmatpush2.msra.mxu0 0.0
  %272 = vmatprep.subr.mxu0 0.0
  %273 = vmatpush2.msra.mxu0 0.0
  %274 = vmatprep.subr.mxu0 0.0
  %275 = vmatpush2.msra.mxu0 0.0
  %276 = vmatprep.mubr.f32.mxu0 0.0
  %277 = vmatmul.mubr.f32.gmra.mxu0 %v112
  %v278 = vpop.f32.mrf.mxu0
  %v279 = vadd.f32 0.0, %v278
  %v280 = vpop.f32.mrf.mxu0
  %281 = vdwg.mxu0
  %282 = vmatprep.subr.mxu0 0.0
  %283 = vmatpush1.msra.mxu0 %v205
  %284 = vmatprep.subr.mxu0 0.0
  %285 = vmatpush1.msra.mxu0 %v204
  %286 = vmatprep.subr.mxu0 0.0
  %287 = vmatpush1.msra.mxu0 %v203
  %288 = vmatprep.subr.mxu0 0.0
  %289 = vmatpush1.msra.mxu0 %v202
  %290 = vmatprep.subr.mxu0 0.0
  %291 = vmatpush1.msra.mxu0 %v201
  %292 = vmatprep.subr.mxu0 0.0
  %293 = vmatpush1.msra.mxu0 %v200
  %294 = vmatprep.subr.mxu0 0.0
  %295 = vmatpush1.msra.mxu0 %v199
  %296 = vmatprep.subr.mxu0 0.0
  %297 = vmatpush1.msra.mxu0 %v198
  %298 = vmatprep.subr.mxu0 0.0
  %299 = vmatpush1.msra.mxu0 %v197
  %300 = vmatprep.subr.mxu0 0.0
  %301 = vmatpush1.msra.mxu0 %v196
  %302 = vmatprep.subr.mxu0 0.0
  %303 = vmatpush1.msra.mxu0 %v195
  %304 = vmatprep.subr.mxu0 0.0
  %305 = vmatpush1.msra.mxu0 %v194
  %306 = vmatprep.subr.mxu0 0.0
  %307 = vmatpush1.msra.mxu0 %v193
  %308 = vmatprep.subr.mxu0 0.0
  %309 = vmatpush1.msra.mxu0 %v192
  %310 = vmatprep.subr.mxu0 0.0
  %311 = vmatpush1.msra.mxu0 %v191
  %312 = vmatprep.subr.mxu0 0.0
  %313 = vmatpush1.msra.mxu0 %v190
  %314 = vmatprep.subr.mxu0 0.0
  %315 = vmatpush2.msra.mxu0 0.0
  %316 = vmatprep.subr.mxu0 0.0
  %317 = vmatpush2.msra.mxu0 0.0
  %318 = vmatprep.subr.mxu0 0.0
  %319 = vmatpush2.msra.mxu0 0.0
  %320 = vmatprep.subr.mxu0 0.0
  %321 = vmatpush2.msra.mxu0 0.0
  %322 = vmatprep.subr.mxu0 0.0
  %323 = vmatpush2.msra.mxu0 0.0
  %324 = vmatprep.subr.mxu0 0.0
  %325 = vmatpush2.msra.mxu0 0.0
  %326 = vmatprep.subr.mxu0 0.0
  %327 = vmatpush2.msra.mxu0 0.0
  %328 = vmatprep.subr.mxu0 0.0
  %329 = vmatpush2.msra.mxu0 0.0
  %330 = vmatprep.subr.mxu0 0.0
  %331 = vmatpush2.msra.mxu0 0.0
  %332 = vmatprep.subr.mxu0 0.0
  %333 = vmatpush2.msra.mxu0 0.0
  %334 = vmatprep.subr.mxu0 0.0
  %335 = vmatpush2.msra.mxu0 0.0
  %336 = vmatprep.subr.mxu0 0.0
  %337 = vmatpush2.msra.mxu0 0.0
  %338 = vmatprep.subr.mxu0 0.0
  %339 = vmatpush2.msra.mxu0 0.0
  %340 = vmatprep.subr.mxu0 0.0
  %341 = vmatpush2.msra.mxu0 0.0
  %342 = vmatprep.subr.mxu0 0.0
  %343 = vmatpush2.msra.mxu0 0.0
  %344 = vmatprep.subr.mxu0 0.0
  %345 = vmatpush2.msra.mxu0 0.0
  %346 = vmatprep.mubr.f32.mxu0 0.0
  %347 = vmatmul.mubr.f32.gmra.mxu0 %v120
  %v348 = vpop.f32.mrf.mxu0
  %v349 = vadd.f32 0.0, %v348
  %v350 = vpop.f32.mrf.mxu0
  %351 = vdwg.mxu0
  %v352 = vmul.f32 %v279, 0.015625
  %v353 = vmul.f32 %v349, 0.015625
  %v354 = vmul.f32 %v352, %v352
  %v355 = vsub.f32 %v353, %v354
  %v356 = vmax.f32 %v355, 0.0
  %v357 = vadd.f32 %v356, 1e-05
  %v358 = vrsqrt.pop %v357
  %vm359 = vcmask 64512
  %v361 = vsel %vm359, %v352, 0
  %363 = vmatprep.subr.mxu0 0.0
  %364 = vmatpush1.msra.mxu0 0.0
  %365 = vmatprep.subr.mxu0 0.0
  %366 = vmatpush1.msra.mxu0 0.0
  %367 = vmatprep.subr.mxu0 0.0
  %368 = vmatpush1.msra.mxu0 0.0
  %369 = vmatprep.subr.mxu0 0.0
  %370 = vmatpush1.msra.mxu0 0.0
  %371 = vmatprep.subr.mxu0 0.0
  %372 = vmatpush1.msra.mxu0 0.0
  %373 = vmatprep.subr.mxu0 0.0
  %374 = vmatpush1.msra.mxu0 0.0
  %375 = vmatprep.subr.mxu0 0.0
  %376 = vmatpush1.msra.mxu0 0.0
  %377 = vmatprep.subr.mxu0 0.0
  %378 = vmatpush1.msra.mxu0 0.0
  %379 = vmatprep.subr.mxu0 0.0
  %380 = vmatpush1.msra.mxu0 0.0
  %381 = vmatprep.subr.mxu0 0.0
  %382 = vmatpush1.msra.mxu0 0.0
  %383 = vmatprep.subr.mxu0 0.0
  %384 = vmatpush1.msra.mxu0 0.0
  %385 = vmatprep.subr.mxu0 0.0
  %386 = vmatpush1.msra.mxu0 0.0
  %387 = vmatprep.subr.mxu0 0.0
  %388 = vmatpush1.msra.mxu0 0.0
  %389 = vmatprep.subr.mxu0 0.0
  %390 = vmatpush1.msra.mxu0 0.0
  %391 = vmatprep.subr.mxu0 0.0
  %392 = vmatpush1.msra.mxu0 0.0
  %393 = vmatprep.subr.mxu0 0.0
  %394 = vmatpush1.msra.mxu0 %v211
  %395 = vmatprep.subr.mxu0 0.0
  %396 = vmatpush2.msra.mxu0 0.0
  %397 = vmatprep.subr.mxu0 0.0
  %398 = vmatpush2.msra.mxu0 0.0
  %399 = vmatprep.subr.mxu0 0.0
  %400 = vmatpush2.msra.mxu0 0.0
  %401 = vmatprep.subr.mxu0 0.0
  %402 = vmatpush2.msra.mxu0 0.0
  %403 = vmatprep.subr.mxu0 0.0
  %404 = vmatpush2.msra.mxu0 0.0
  %405 = vmatprep.subr.mxu0 0.0
  %406 = vmatpush2.msra.mxu0 0.0
  %407 = vmatprep.subr.mxu0 0.0
  %408 = vmatpush2.msra.mxu0 0.0
  %409 = vmatprep.subr.mxu0 0.0
  %410 = vmatpush2.msra.mxu0 0.0
  %411 = vmatprep.subr.mxu0 0.0
  %412 = vmatpush2.msra.mxu0 0.0
  %413 = vmatprep.subr.mxu0 0.0
  %414 = vmatpush2.msra.mxu0 0.0
  %415 = vmatprep.subr.mxu0 0.0
  %416 = vmatpush2.msra.mxu0 0.0
  %417 = vmatprep.subr.mxu0 0.0
  %418 = vmatpush2.msra.mxu0 0.0
  %419 = vmatprep.subr.mxu0 0.0
  %420 = vmatpush2.msra.mxu0 0.0
  %421 = vmatprep.subr.mxu0 0.0
  %422 = vmatpush2.msra.mxu0 0.0
  %423 = vmatprep.subr.mxu0 0.0
  %424 = vmatpush2.msra.mxu0 0.0
  %425 = vmatprep.subr.mxu0 0.0
  %426 = vmatpush2.msra.mxu0 0.0
  %427 = vmatprep.mubr.f32.mxu0 0.0
  %428 = vmatmul.mubr.f32.gmra.mxu0 %v361
  %v429 = vpop.f32.mrf.mxu0
  %v430 = vadd.f32 0.0, %v429
  %v431 = vpop.f32.mrf.mxu0
  %432 = vdwg.mxu0
  %v434 = vsel %vm359, %v358, 0
  %436 = vmatprep.subr.mxu0 0.0
  %437 = vmatpush1.msra.mxu0 0.0
  %438 = vmatprep.subr.mxu0 0.0
  %439 = vmatpush1.msra.mxu0 0.0
  %440 = vmatprep.subr.mxu0 0.0
  %441 = vmatpush1.msra.mxu0 0.0
  %442 = vmatprep.subr.mxu0 0.0
  %443 = vmatpush1.msra.mxu0 0.0
  %444 = vmatprep.subr.mxu0 0.0
  %445 = vmatpush1.msra.mxu0 0.0
  %446 = vmatprep.subr.mxu0 0.0
  %447 = vmatpush1.msra.mxu0 0.0
  %448 = vmatprep.subr.mxu0 0.0
  %449 = vmatpush1.msra.mxu0 0.0
  %450 = vmatprep.subr.mxu0 0.0
  %451 = vmatpush1.msra.mxu0 0.0
  %452 = vmatprep.subr.mxu0 0.0
  %453 = vmatpush1.msra.mxu0 0.0
  %454 = vmatprep.subr.mxu0 0.0
  %455 = vmatpush1.msra.mxu0 0.0
  %456 = vmatprep.subr.mxu0 0.0
  %457 = vmatpush1.msra.mxu0 0.0
  %458 = vmatprep.subr.mxu0 0.0
  %459 = vmatpush1.msra.mxu0 0.0
  %460 = vmatprep.subr.mxu0 0.0
  %461 = vmatpush1.msra.mxu0 0.0
  %462 = vmatprep.subr.mxu0 0.0
  %463 = vmatpush1.msra.mxu0 0.0
  %464 = vmatprep.subr.mxu0 0.0
  %465 = vmatpush1.msra.mxu0 0.0
  %466 = vmatprep.subr.mxu0 0.0
  %467 = vmatpush1.msra.mxu0 %v211
  %468 = vmatprep.subr.mxu0 0.0
  %469 = vmatpush2.msra.mxu0 0.0
  %470 = vmatprep.subr.mxu0 0.0
  %471 = vmatpush2.msra.mxu0 0.0
  %472 = vmatprep.subr.mxu0 0.0
  %473 = vmatpush2.msra.mxu0 0.0
  %474 = vmatprep.subr.mxu0 0.0
  %475 = vmatpush2.msra.mxu0 0.0
  %476 = vmatprep.subr.mxu0 0.0
  %477 = vmatpush2.msra.mxu0 0.0
  %478 = vmatprep.subr.mxu0 0.0
  %479 = vmatpush2.msra.mxu0 0.0
  %480 = vmatprep.subr.mxu0 0.0
  %481 = vmatpush2.msra.mxu0 0.0
  %482 = vmatprep.subr.mxu0 0.0
  %483 = vmatpush2.msra.mxu0 0.0
  %484 = vmatprep.subr.mxu0 0.0
  %485 = vmatpush2.msra.mxu0 0.0
  %486 = vmatprep.subr.mxu0 0.0
  %487 = vmatpush2.msra.mxu0 0.0
  %488 = vmatprep.subr.mxu0 0.0
  %489 = vmatpush2.msra.mxu0 0.0
  %490 = vmatprep.subr.mxu0 0.0
  %491 = vmatpush2.msra.mxu0 0.0
  %492 = vmatprep.subr.mxu0 0.0
  %493 = vmatpush2.msra.mxu0 0.0
  %494 = vmatprep.subr.mxu0 0.0
  %495 = vmatpush2.msra.mxu0 0.0
  %496 = vmatprep.subr.mxu0 0.0
  %497 = vmatpush2.msra.mxu0 0.0
  %498 = vmatprep.subr.mxu0 0.0
  %499 = vmatpush2.msra.mxu0 0.0
  %500 = vmatprep.mubr.f32.mxu0 0.0
  %501 = vmatmul.mubr.f32.gmra.mxu0 %v434
  %v502 = vpop.f32.mrf.mxu0
  %v503 = vadd.f32 0.0, %v502
  %v504 = vpop.f32.mrf.mxu0
  %505 = vdwg.mxu0
  %v506 = vlaneseq
  %v507 = vshrl.u32 %v506, 7
  %v508 = vsub.s32 0, %v507
  %v509 = vrot.slane %v430, %v508
  %v510 = vsub.f32 %v102, %v509
  %v511 = vlaneseq
  %v512 = vshrl.u32 %v511, 7
  %v513 = vsub.s32 0, %v512
  %v514 = vrot.slane %v503, %v513
  %v515 = vmul.f32 %v510, %v514
  %v516 = vld [vmem:[%s3] sm:$0xf]
  %v517 = vmul.f32 %v515, %v516
  %v518 = vsel %vm105, %v517, 0.0
  %v519 = vrot.slane %v518, 4
  %v520 = vadd.f32 %v518, %v519
  %v521 = vrot.slane %v520, 2
  %v522 = vadd.f32 %v520, %v521
  %v523 = vrot.slane %v522, 1
  %v524 = vadd.f32 %v522, %v523
  %v525 = vld [vmem:[%s4] sm:$0x1]
  %v526 = vadd.f32 %v524, %v525
  %527 = vst [vmem:[%s5] sm:$0x1] %v526
  // Predicated region
  $region22: #{output_layer.1} parent=0 // pred_check
    _
  $region23: #{output_layer.1} parent=0 // pred_check_branch
    %529 = sbr.rel (0) target = $region25
  $region24: #{output_layer.1} parent=0 // pred_region
    _
  $region25: #{output_layer.1} parent=0 // pred_fallthru
    _
  // Predicated region
  $region26: #{output_layer.1} parent=0 // pred_check
    _
  $region27: #{output_layer.1} parent=0 // pred_check_branch
    %531 = sbr.rel (0) target = $region29
  $region28: #{output_layer.1} parent=0 // pred_region
    _
  $region29: #{output_layer.1} parent=0 // pred_fallthru
    _

</llo_original>
